<compile_context>
chip_gen: v5e
topology: v5e:2x2
jax: 0.10.0
libtpu: 0.0.40
codegen_flags: <defaults>
</compile_context>

<pallas_src>
import functools

import jax
import jax.numpy as jnp
from jax.experimental import pallas as pl
from jax.experimental.pallas import tpu as pltpu

SUBLANE_BF16 = 16      # bf16 packs 16 rows per vreg sublane group
MAX_BATCH_TILE = 512


def _round_up(n, m):
    return ((n + m - 1) // m) * m


def _pad_dim(d):
    """Pad a feature dim to a lane-friendly width.

    128 (lane width) is mandatory; prefer 256 (full v6e/v7x MXU tile) when the extra
    zero padding over the 128-aligned size is <= 12.5%."""
    p128 = _round_up(d, 128)
    p256 = _round_up(d, 256)
    return p256 if p256 * 8 <= p128 * 9 else p128


def _vmem_cap_bytes():
    """Best-effort physical per-core VMEM minus headroom for compiler scratch/spill."""
    cap = 128 << 20
    try:
        info = pltpu.get_tpu_info()
        cap = int(getattr(info, "vmem_capacity_bytes", cap))
    except Exception:
        pass
    return max(cap - (12 << 20), 32 << 20)


def _pick_batch_tiling(batch):
    """Pick a 16-aligned batch tile with low padding waste.

    Also splits a single-step grid into two steps (when the padded batch allows) so the
    'parallel' batch axis can shard across v7x's two TensorCores."""
    padded = _round_up(max(batch, SUBLANE_BF16), SUBLANE_BF16)
    tb = min(MAX_BATCH_TILE, padded)
    tb -= tb % SUBLANE_BF16
    chosen = SUBLANE_BF16
    while tb >= SUBLANE_BF16:
        waste = _round_up(padded, tb) - padded
        if waste * 16 <= padded:            # <= 6.25% padded rows
            chosen = tb
            break
        tb -= SUBLANE_BF16
    padded = _round_up(padded, chosen)
    if padded // chosen == 1 and padded % (2 * SUBLANE_BF16) == 0 and padded >= 2 * SUBLANE_BF16:
        chosen = padded // 2                # >=2 grid steps -> both v7x TCs get work
    return padded, chosen


# --------------------------------------------------------------------------
# Kernels
# --------------------------------------------------------------------------
def _make_resident_kernel(num_hidden, has_output):
    """[dot + folded-BN bias + ReLU] * num_hidden (+ final dot).  Weights VMEM-resident."""

    def kernel(*refs):
        # refs = x, (w_0, b_0), ..., (w_{n-1}, b_{n-1}), [w_out], o
        x_ref = refs[0]
        idx = 1
        h = x_ref[...]                                              # (TB, Din_pad) bf16
        for _ in range(num_hidden):
            w_ref, b_ref = refs[idx], refs[idx + 1]
            idx += 2
            z = jnp.dot(h, w_ref[...], preferred_element_type=jnp.float32)  # MXU, f32 acc
            z = z + b_ref[...]                                      # folded Linear+BN bias
            h = jnp.maximum(z, 0.0).astype(jnp.bfloat16)            # ReLU; dropout = identity
        if has_output:
            w_ref = refs[idx]
            idx += 1
            out = jnp.dot(h, w_ref[...], preferred_element_type=jnp.float32)
        else:
            out = h
        o_ref = refs[idx]
        o_ref[...] = out.astype(jnp.float32)

    return kernel


def _make_streaming_kernel(num_hidden, has_output, layer_dims):
    """Same math, but layer weights live in HBM and are double-buffered into a 2-slot
    VMEM scratch; layer k+1's weight DMA overlaps layer k's matmul."""
    n_layers = num_hidden + (1 if has_output else 0)

    def kernel(*refs):
        # refs = x, b_0..b_{nh-1}, w_hbm_0..w_hbm_{nl-1}, o, wbuf, sem
        x_ref = refs[0]
        b_refs = refs[1:1 + num_hidden]
        w_refs = refs[1 + num_hidden:1 + num_hidden + n_layers]
        o_ref = refs[1 + num_hidden + n_layers]
        wbuf = refs[1 + num_hidden + n_layers + 1]
        sem = refs[1 + num_hidden + n_layers + 2]

        def wcopy(k, slot):
            # Streamed weights are pre-padded to a common (max_di, max_do) panel so every
            # DMA is a uniform full-slot copy.
            return pltpu.make_async_copy(w_refs[k], wbuf.at[slot], sem.at[slot])

        wcopy(0, 0).start()
        h = x_ref[...]
        for k in range(n_layers):
            slot = k & 1
            if k + 1 < n_layers:
                wcopy(k + 1, 1 - slot).start()      # prefetch next layer behind this matmul
            wcopy(k, slot).wait()
            di, do = layer_dims[k]
            w = wbuf[slot, :di, :do]
            z = jnp.dot(h, w, preferred_element_type=jnp.float32)
            if has_output and k == n_layers - 1:
                h = z                               # final Linear has no bias / activation
            else:
                z = z + b_refs[k][...]
                h = jnp.maximum(z, 0.0).astype(jnp.bfloat16)
        o_ref[...] = h.astype(jnp.float32)

    return kernel


# --------------------------------------------------------------------------
# Wrapper: padding, BlockSpecs, grid over batch, VMEM budgeting
# --------------------------------------------------------------------------
@functools.partial(jax.jit, static_argnames=("out_features", "streaming", "weight_buffers"))
def _fused_mlp_forward(x, weights, biases, out_w, *, out_features, streaming, weight_buffers):
    B, Din = x.shape
    Din_pad = weights[0].shape[0]
    num_hidden = len(weights)
    has_output = out_w is not None
    all_w = list(weights) + ([out_w] if has_output else [])
    last_pad = all_w[-1].shape[1]

    padded_B, TB = _pick_batch_tiling(B)
    x_p = jnp.pad(x.astype(jnp.bfloat16), ((0, padded_B - B), (0, Din_pad - Din)))

    grid = (padded_B // TB,)
    x_spec = pl.BlockSpec((TB, Din_pad), lambda i: (i, 0))
    out_spec = pl.BlockSpec((TB, last_pad), lambda i: (i, 0))

    def const_spec(shape):
        # Constant-index blocks never change across the batch grid: single-buffer them so
        # they don't cost 2x their size in VMEM.
        if weight_buffers == 1:
            return pl.BlockSpec(shape, lambda i: (0, 0), pipeline_mode=pl.Buffered(1))
        return pl.BlockSpec(shape, lambda i: (0, 0))

    weight_bytes = sum(int(w.size) * w.dtype.itemsize for w in all_w)
    bias_bytes = sum(int(b.size) * b.dtype.itemsize for b in biases)
    io_bytes = 2 * TB * Din_pad * 2 + 2 * TB * last_pad * 4       # double-buffered x / out
    max_do = max(int(w.shape[1]) for w in all_w)
    act_bytes = 2 * TB * max_do * (4 + 2)                          # per-layer intermediates

    flops = 2 * padded_B * sum(int(w.shape[0]) * int(w.shape[1]) for w in all_w)
    bytes_accessed = (padded_B * Din_pad * 2 + weight_bytes + bias_bytes
                      + padded_B * last_pad * 4)
    cost = pl.CostEstimate(flops=flops, transcendentals=0, bytes_accessed=bytes_accessed)

    if not streaming:
        kernel_fn = _make_resident_kernel(num_hidden, has_output)
        in_specs = [x_spec]
        operands = [x_p]
        for w, b in zip(weights, biases):
            in_specs += [const_spec(w.shape), const_spec(b.shape)]
            operands += [w, b]
        if has_output:
            in_specs.append(const_spec(out_w.shape))
            operands.append(out_w)
        scratch_shapes = []
        need = weight_buffers * (weight_bytes + bias_bytes) + io_bytes + act_bytes
    else:
        layer_dims = tuple((int(w.shape[0]), int(w.shape[1])) for w in all_w)
        max_di = max(d[0] for d in layer_dims)
        max_do2 = max(d[1] for d in layer_dims)
        # Uniform (max_di, max_do) HBM panels -> uniform full-slot DMAs.
        stream_w = [jnp.pad(w, ((0, max_di - w.shape[0]), (0, max_do2 - w.shape[1])))
                    for w in all_w]
        kernel_fn = _make_streaming_kernel(num_hidden, has_output, layer_dims)
        in_specs = [x_spec]
        operands = [x_p]
        for b in biases:
            in_specs.append(const_spec(b.shape))
            operands.append(b)
        for w in stream_w:
            in_specs.append(pl.BlockSpec(memory_space=pl.ANY))     # stays in HBM
            operands.append(w)
        scratch_shapes = [pltpu.VMEM((2, max_di, max_do2), jnp.bfloat16),
                          pltpu.SemaphoreType.DMA((2,))]
        need = 2 * max_di * max_do2 * 2 + bias_bytes + io_bytes + act_bytes

    cap = _vmem_cap_bytes()
    vmem_limit = int(min(max(need + need // 2 + (4 << 20), 32 << 20), cap))

    out_padded = pl.pallas_call(
        kernel_fn,
        out_shape=jax.ShapeDtypeStruct((padded_B, last_pad), jnp.float32),
        grid=grid,
        in_specs=in_specs,
        out_specs=out_spec,
        scratch_shapes=scratch_shapes,
        compiler_params=pltpu.CompilerParams(
            dimension_semantics=("parallel",),      # batch tiles shard across TCs (v7x)
            vmem_limit_bytes=vmem_limit,
        ),
        cost_estimate=cost,
    )(*operands)

    return out_padded[:B, :out_features]


_WEIGHT_BUFFER_CACHE = {"buffers": 1}


def deep_network_forward(x, weights, biases, out_w, *, out_features, force_streaming=False):
    """Eval-mode forward of Deep_NetWork (folded BN, bf16 matmuls with f32 accumulation)."""
    all_w = list(weights) + ([out_w] if out_w is not None else [])
    weight_bytes = sum(int(w.size) * w.dtype.itemsize for w in all_w)
    bias_bytes = sum(int(b.size) * b.dtype.itemsize for b in biases)
    # Stream layer weights from HBM when they cannot stay VMEM-resident.
    streaming = force_streaming or (weight_bytes + bias_bytes + (16 << 20) > _vmem_cap_bytes())

    bufs = _WEIGHT_BUFFER_CACHE["buffers"]
    try:
        return _fused_mlp_forward(x, weights, biases, out_w, out_features=out_features,
                                  streaming=streaming, weight_buffers=bufs)
    except Exception:
        if bufs == 1:
            # Safety net: if this JAX/Mosaic build rejects single-buffered constant blocks,
            # fall back to default double-buffering (correctness unchanged).
            _WEIGHT_BUFFER_CACHE["buffers"] = 2
            return _fused_mlp_forward(x, weights, biases, out_w, out_features=out_features,
                                      streaming=streaming, weight_buffers=2)
        raise


# --------------------------------------------------------------------------
# Parameter setup (plain JAX, outside the hot path)
# --------------------------------------------------------------------------
def init_deep_network_params(key, input_dim, hidden_dims, output_layer):
    """PyTorch-style Linear + BatchNorm1d (eval) parameters.  Weights stored (in, out)."""
    eps = 1e-5
    params = []
    d_in = input_dim
    for d_out in hidden_dims:
        key, kw, kb, kg, kbeta, km, kv = jax.random.split(key, 7)
        bound = 1.0 / (d_in ** 0.5)
        w = jax.random.uniform(kw, (d_in, d_out), jnp.float32, -bound, bound)
        b = jax.random.uniform(kb, (d_out,), jnp.float32, -bound, bound)
        gamma = 1.0 + 0.1 * jax.random.normal(kg, (d_out,), jnp.float32)
        beta = 0.1 * jax.random.normal(kbeta, (d_out,), jnp.float32)
        running_mean = 0.05 * jax.random.normal(km, (d_out,), jnp.float32)
        running_var = 1.0 + 0.1 * jax.random.uniform(kv, (d_out,), jnp.float32)
        scale = gamma / jnp.sqrt(running_var + eps)
        shift = beta - running_mean * scale
        params.append(dict(w=w, b=b, scale=scale, shift=shift))
        d_in = d_out
    out_w = None
    if output_layer:
        key, kw = jax.random.split(key)
        bound = 1.0 / (d_in ** 0.5)
        out_w = jax.random.uniform(kw, (d_in, output_layer), jnp.float32, -bound, bound)
    return params, out_w


def fold_and_pad_params(params, out_w, input_dim):
    """Fold BN into the Linear, pad feature dims (128/256-aligned), cast weights to bf16."""
    weights, biases = [], []
    d_in = input_dim
    for layer in params:
        w = layer["w"] * layer["scale"][None, :]            # fold BN scale into the weight
        b = layer["b"] * layer["scale"] + layer["shift"]    # fold BN into the bias
        d_out = w.shape[1]
        di_p, do_p = _pad_dim(d_in), _pad_dim(d_out)
        weights.append(jnp.pad(w, ((0, di_p - d_in), (0, do_p - d_out))).astype(jnp.bfloat16))
        biases.append(jnp.pad(b, (0, do_p - d_out)).reshape(1, do_p).astype(jnp.float32))
        d_in = d_out
    out_w_p = None
    out_features = d_in
    if out_w is not None:
        d_out = out_w.shape[1]
        di_p, do_p = _pad_dim(d_in), _pad_dim(d_out)
        out_w_p = jnp.pad(out_w, ((0, di_p - d_in), (0, do_p - d_out))).astype(jnp.bfloat16)
        out_features = d_out
    return weights, biases, out_w_p, out_features


# --------------------------------------------------------------------------
# References for correctness checks
# --------------------------------------------------------------------------
def reference_forward_f32(x, params, out_w):
    """Unfolded, full-f32 reference of the PyTorch module (eval mode)."""
    h = x
    for layer in params:
        z = h @ layer["w"] + layer["b"]
        z = z * layer["scale"] + layer["shift"]
        h = jnp.maximum(z, 0.0)
    if out_w is not None:
        h = h @ out_w
    return h


def reference_forward_bf16(x, weights, biases, out_w, out_features):
    """Same math/dtypes as the kernel (folded, padded, bf16 operands, f32 accumulate)."""
    Din = x.shape[1]
    h = jnp.pad(x.astype(jnp.bfloat16), ((0, 0), (0, weights[0].shape[0] - Din)))
    for w, b in zip(weights, biases):
        z = jnp.dot(h, w, preferred_element_type=jnp.float32) + b
        h = jnp.maximum(z, 0.0).astype(jnp.bfloat16)
    if out_w is not None:
        z = jnp.dot(h, out_w, preferred_element_type=jnp.float32)
    else:
        z = h.astype(jnp.float32)
    return z[:, :out_features]


# --------------------------------------------------------------------------
# Demo / self-test
# --------------------------------------------------------------------------
if __name__ == "__main__":
    # x: (batch_size, embed_dim * field_dim) -> output (batch_size, 1)
    batch = 8
    input_dim = 32
    hidden_dims = [64, 32]
    dropout = 0.5          # identity at inference
    output_layer = 1

    key = jax.random.PRNGKey(0)
    key, kx = jax.random.split(key)
    x = jax.random.normal(kx, (batch, input_dim), jnp.float32)

    params, out_w = init_deep_network_params(key, input_dim, hidden_dims, output_layer)
    weights, biases, out_w_p, out_features = fold_and_pad_params(params, out_w, input_dim)

    # 1) Default path: weights VMEM-resident, single-buffered constant blocks.
    y = deep_network_forward(x, weights, biases, out_w_p, out_features=out_features)
    y = jax.block_until_ready(y)

    # 2) Weight-streaming fallback path (HBM weights + double-buffered DMA), forced here so
    #    both code paths are exercised even at toy sizes.
    y_stream = deep_network_forward(x, weights, biases, out_w_p,
                                    out_features=out_features, force_streaming=True)
    y_stream = jax.block_until_ready(y_stream)

    # Exact-math check vs a JAX reference using the identical bf16/f32 recipe.
    y_bf16_ref = reference_forward_bf16(x, weights, biases, out_w_p, out_features)
    # Semantic check vs the unfolded full-f32 module (looser: bf16 operand rounding).
    y_f32_ref = reference_forward_f32(x, params, out_w)

    assert y.shape == (batch, output_layer), y.shape
    assert jnp.allclose(y, y_bf16_ref, atol=1e-4, rtol=1e-4), "resident path vs bf16 reference"
    assert jnp.allclose(y_stream, y_bf16_ref, atol=1e-4, rtol=1e-4), "streaming path vs bf16 reference"
    assert jnp.allclose(y, y_f32_ref, atol=5e-2, rtol=5e-2), "resident path vs f32 reference"

    print("KERNEL_OK")
</pallas_src>

<mosaic_0001>
module attributes {stable_mosaic.version = 11 : i64} {
  func.func @kernel(%arg0: i32, %arg1: memref<16x128xbf16, #tpu.memory_space<vmem>>, %arg2: memref<128x128xbf16, #tpu.memory_space<vmem>>, %arg3: memref<1x128xf32, #tpu.memory_space<vmem>>, %arg4: memref<128x128xbf16, #tpu.memory_space<vmem>>, %arg5: memref<1x128xf32, #tpu.memory_space<vmem>>, %arg6: memref<128x128xbf16, #tpu.memory_space<vmem>>, %arg7: memref<16x128xf32, #tpu.memory_space<vmem>>) attributes {dimension_semantics = [#tpu.dimension_semantics<parallel>], iteration_bounds = array<i64: 1>, scalar_prefetch = 0 : i64, scratch_operands = 0 : i64, tpu.core_type = #tpu.core_type<tc>, window_params = [{transform_indices = @transform_0, window_bounds = array<i64: 16, 128>}, {pipeline_mode = #tpu.pipeline_mode<synchronous>, transform_indices = @transform_1, window_bounds = array<i64: 128, 128>}, {pipeline_mode = #tpu.pipeline_mode<synchronous>, transform_indices = @transform_2, window_bounds = array<i64: 1, 128>}, {pipeline_mode = #tpu.pipeline_mode<synchronous>, transform_indices = @transform_3, window_bounds = array<i64: 128, 128>}, {pipeline_mode = #tpu.pipeline_mode<synchronous>, transform_indices = @transform_4, window_bounds = array<i64: 1, 128>}, {pipeline_mode = #tpu.pipeline_mode<synchronous>, transform_indices = @transform_5, window_bounds = array<i64: 128, 128>}, {transform_indices = @transform_6, window_bounds = array<i64: 16, 128>}]} {
    %c0 = arith.constant 0 : index
    %c0_0 = arith.constant 0 : index
    %0 = vector.load %arg1[%c0, %c0_0] : memref<16x128xbf16, #tpu.memory_space<vmem>>, vector<16x128xbf16>
    %c0_1 = arith.constant 0 : index
    %c0_2 = arith.constant 0 : index
    %1 = vector.load %arg2[%c0_1, %c0_2] : memref<128x128xbf16, #tpu.memory_space<vmem>>, vector<128x128xbf16>
    %cst = arith.constant dense<0.000000e+00> : vector<16x128xf32>
    %2 = tpu.matmul %0, %1, %cst {dimension_numbers = #tpu.dot_dimension_numbers<[1], [0], [0], [1], [0, 0, 1, 1], [], []>} : vector<16x128xbf16>, vector<128x128xbf16>, vector<16x128xf32> -> vector<16x128xf32>
    %c0_3 = arith.constant 0 : index
    %c0_4 = arith.constant 0 : index
    %3 = vector.load %arg3[%c0_3, %c0_4] : memref<1x128xf32, #tpu.memory_space<vmem>>, vector<1x128xf32>
    %4 = vector.broadcast %3 : vector<1x128xf32> to vector<16x128xf32>
    %5 = arith.addf %2, %4 : vector<16x128xf32>
    %cst_5 = arith.constant 0.000000e+00 : f32
    %6 = vector.broadcast %cst_5 : f32 to vector<16x128xf32>
    %7 = arith.maximumf %5, %6 : vector<16x128xf32>
    %8 = arith.truncf %7 : vector<16x128xf32> to vector<16x128xbf16>
    %c0_6 = arith.constant 0 : index
    %c0_7 = arith.constant 0 : index
    %9 = vector.load %arg4[%c0_6, %c0_7] : memref<128x128xbf16, #tpu.memory_space<vmem>>, vector<128x128xbf16>
    %cst_8 = arith.constant dense<0.000000e+00> : vector<16x128xf32>
    %10 = tpu.matmul %8, %9, %cst_8 {dimension_numbers = #tpu.dot_dimension_numbers<[1], [0], [0], [1], [0, 0, 1, 1], [], []>} : vector<16x128xbf16>, vector<128x128xbf16>, vector<16x128xf32> -> vector<16x128xf32>
    %c0_9 = arith.constant 0 : index
    %c0_10 = arith.constant 0 : index
    %11 = vector.load %arg5[%c0_9, %c0_10] : memref<1x128xf32, #tpu.memory_space<vmem>>, vector<1x128xf32>
    %12 = vector.broadcast %11 : vector<1x128xf32> to vector<16x128xf32>
    %13 = arith.addf %10, %12 : vector<16x128xf32>
    %cst_11 = arith.constant 0.000000e+00 : f32
    %14 = vector.broadcast %cst_11 : f32 to vector<16x128xf32>
    %15 = arith.maximumf %13, %14 : vector<16x128xf32>
    %16 = arith.truncf %15 : vector<16x128xf32> to vector<16x128xbf16>
    %c0_12 = arith.constant 0 : index
    %c0_13 = arith.constant 0 : index
    %17 = vector.load %arg6[%c0_12, %c0_13] : memref<128x128xbf16, #tpu.memory_space<vmem>>, vector<128x128xbf16>
    %cst_14 = arith.constant dense<0.000000e+00> : vector<16x128xf32>
    %18 = tpu.matmul %16, %17, %cst_14 {dimension_numbers = #tpu.dot_dimension_numbers<[1], [0], [0], [1], [0, 0, 1, 1], [], []>} : vector<16x128xbf16>, vector<128x128xbf16>, vector<16x128xf32> -> vector<16x128xf32>
    %c0_15 = arith.constant 0 : index
    %c0_16 = arith.constant 0 : index
    %19 = vector.load %arg7[%c0_15, %c0_16] : memref<16x128xf32, #tpu.memory_space<vmem>>, vector<16x128xf32>
    tpu.vector_store %arg7[%c0_15, %c0_16], %18 {strides = array<i32>} : memref<16x128xf32, #tpu.memory_space<vmem>>, vector<16x128xf32>,
    return
  }
  func.func @transform_0(%arg0: i32) -> (i32, i32) {
    %c0_i32 = arith.constant 0 : i32
    %c0_i32_0 = arith.constant 0 : i32
    return %arg0, %c0_i32 : i32, i32
  }
  func.func @transform_1(%arg0: i32) -> (i32, i32) {
    %c0_i32 = arith.constant 0 : i32
    %c0_i32_0 = arith.constant 0 : i32
    %c0_i32_1 = arith.constant 0 : i32
    return %c0_i32, %c0_i32_0 : i32, i32
  }
  func.func @transform_2(%arg0: i32) -> (i32, i32) {
    %c0_i32 = arith.constant 0 : i32
    %c0_i32_0 = arith.constant 0 : i32
    %c0_i32_1 = arith.constant 0 : i32
    return %c0_i32, %c0_i32_0 : i32, i32
  }
  func.func @transform_3(%arg0: i32) -> (i32, i32) {
    %c0_i32 = arith.constant 0 : i32
    %c0_i32_0 = arith.constant 0 : i32
    %c0_i32_1 = arith.constant 0 : i32
    return %c0_i32, %c0_i32_0 : i32, i32
  }
  func.func @transform_4(%arg0: i32) -> (i32, i32) {
    %c0_i32 = arith.constant 0 : i32
    %c0_i32_0 = arith.constant 0 : i32
    %c0_i32_1 = arith.constant 0 : i32
    return %c0_i32, %c0_i32_0 : i32, i32
  }
  func.func @transform_5(%arg0: i32) -> (i32, i32) {
    %c0_i32 = arith.constant 0 : i32
    %c0_i32_0 = arith.constant 0 : i32
    %c0_i32_1 = arith.constant 0 : i32
    return %c0_i32, %c0_i32_0 : i32, i32
  }
  func.func @transform_6(%arg0: i32) -> (i32, i32) {
    %c0_i32 = arith.constant 0 : i32
    %c0_i32_0 = arith.constant 0 : i32
    return %arg0, %c0_i32 : i32, i32
  }
}

module attributes {stable_mosaic.version = 11 : i64} {
  func.func @kernel(%arg0: i32, %arg1: memref<16x128xbf16, #tpu.memory_space<vmem>>, %arg2: memref<128x128xbf16, #tpu.memory_space<vmem>>, %arg3: memref<1x128xf32, #tpu.memory_space<vmem>>, %arg4: memref<128x128xbf16, #tpu.memory_space<vmem>>, %arg5: memref<1x128xf32, #tpu.memory_space<vmem>>, %arg6: memref<128x128xbf16, #tpu.memory_space<vmem>>, %arg7: memref<16x128xf32, #tpu.memory_space<vmem>>) attributes {dimension_semantics = [#tpu.dimension_semantics<parallel>], iteration_bounds = array<i64: 1>, scalar_prefetch = 0 : i64, scratch_operands = 0 : i64, tpu.core_type = #tpu.core_type<tc>, window_params = [{transform_indices = @transform_0, window_bounds = array<i64: 16, 128>}, {pipeline_mode = #tpu.pipeline_mode<synchronous>, transform_indices = @transform_1, window_bounds = array<i64: 128, 128>}, {pipeline_mode = #tpu.pipeline_mode<synchronous>, transform_indices = @transform_2, window_bounds = array<i64: 1, 128>}, {pipeline_mode = #tpu.pipeline_mode<synchronous>, transform_indices = @transform_3, window_bounds = array<i64: 128, 128>}, {pipeline_mode = #tpu.pipeline_mode<synchronous>, transform_indices = @transform_4, window_bounds = array<i64: 1, 128>}, {pipeline_mode = #tpu.pipeline_mode<synchronous>, transform_indices = @transform_5, window_bounds = array<i64: 128, 128>}, {transform_indices = @transform_6, window_bounds = array<i64: 16, 128>}]} {
    %c0 = arith.constant 0 : index
    %c0_0 = arith.constant 0 : index
    %0 = vector.load %arg1[%c0, %c0_0] : memref<16x128xbf16, #tpu.memory_space<vmem>>, vector<16x128xbf16>
    %c0_1 = arith.constant 0 : index
    %c0_2 = arith.constant 0 : index
    %1 = vector.load %arg2[%c0_1, %c0_2] : memref<128x128xbf16, #tpu.memory_space<vmem>>, vector<128x128xbf16>
    %cst = arith.constant dense<0.000000e+00> : vector<16x128xf32>
    %2 = tpu.matmul %0, %1, %cst {dimension_numbers = #tpu.dot_dimension_numbers<[1], [0], [0], [1], [0, 0, 1, 1], [], []>} : vector<16x128xbf16>, vector<128x128xbf16>, vector<16x128xf32> -> vector<16x128xf32>
    %c0_3 = arith.constant 0 : index
    %c0_4 = arith.constant 0 : index
    %3 = vector.load %arg3[%c0_3, %c0_4] : memref<1x128xf32, #tpu.memory_space<vmem>>, vector<1x128xf32>
    %4 = vector.broadcast %3 : vector<1x128xf32> to vector<16x128xf32>
    %5 = arith.addf %2, %4 : vector<16x128xf32>
    %cst_5 = arith.constant 0.000000e+00 : f32
    %6 = vector.broadcast %cst_5 : f32 to vector<16x128xf32>
    %7 = arith.maximumf %5, %6 : vector<16x128xf32>
    %8 = arith.truncf %7 : vector<16x128xf32> to vector<16x128xbf16>
    %c0_6 = arith.constant 0 : index
    %c0_7 = arith.constant 0 : index
    %9 = vector.load %arg4[%c0_6, %c0_7] : memref<128x128xbf16, #tpu.memory_space<vmem>>, vector<128x128xbf16>
    %cst_8 = arith.constant dense<0.000000e+00> : vector<16x128xf32>
    %10 = tpu.matmul %8, %9, %cst_8 {dimension_numbers = #tpu.dot_dimension_numbers<[1], [0], [0], [1], [0, 0, 1, 1], [], []>} : vector<16x128xbf16>, vector<128x128xbf16>, vector<16x128xf32> -> vector<16x128xf32>
    %c0_9 = arith.constant 0 : index
    %c0_10 = arith.constant 0 : index
    %11 = vector.load %arg5[%c0_9, %c0_10] : memref<1x128xf32, #tpu.memory_space<vmem>>, vector<1x128xf32>
    %12 = vector.broadcast %11 : vector<1x128xf32> to vector<16x128xf32>
    %13 = arith.addf %10, %12 : vector<16x128xf32>
    %cst_11 = arith.constant 0.000000e+00 : f32
    %14 = vector.broadcast %cst_11 : f32 to vector<16x128xf32>
    %15 = arith.maximumf %13, %14 : vector<16x128xf32>
    %16 = arith.truncf %15 : vector<16x128xf32> to vector<16x128xbf16>
    %c0_12 = arith.constant 0 : index
    %c0_13 = arith.constant 0 : index
    %17 = vector.load %arg6[%c0_12, %c0_13] : memref<128x128xbf16, #tpu.memory_space<vmem>>, vector<128x128xbf16>
    %cst_14 = arith.constant dense<0.000000e+00> : vector<16x128xf32>
    %18 = tpu.matmul %16, %17, %cst_14 {dimension_numbers = #tpu.dot_dimension_numbers<[1], [0], [0], [1], [0, 0, 1, 1], [], []>} : vector<16x128xbf16>, vector<128x128xbf16>, vector<16x128xf32> -> vector<16x128xf32>
    %c0_15 = arith.constant 0 : index
    %c0_16 = arith.constant 0 : index
    %19 = vector.load %arg7[%c0_15, %c0_16] : memref<16x128xf32, #tpu.memory_space<vmem>>, vector<16x128xf32>
    tpu.vector_store %arg7[%c0_15, %c0_16], %18 {strides = array<i32>} : memref<16x128xf32, #tpu.memory_space<vmem>>, vector<16x128xf32>,
    return
  }
  func.func @transform_0(%arg0: i32) -> (i32, i32) {
    %c0_i32 = arith.constant 0 : i32
    %c0_i32_0 = arith.constant 0 : i32
    return %arg0, %c0_i32 : i32, i32
  }
  func.func @transform_1(%arg0: i32) -> (i32, i32) {
    %c0_i32 = arith.constant 0 : i32
    %c0_i32_0 = arith.constant 0 : i32
    %c0_i32_1 = arith.constant 0 : i32
    return %c0_i32, %c0_i32_0 : i32, i32
  }
  func.func @transform_2(%arg0: i32) -> (i32, i32) {
    %c0_i32 = arith.constant 0 : i32
    %c0_i32_0 = arith.constant 0 : i32
    %c0_i32_1 = arith.constant 0 : i32
    return %c0_i32, %c0_i32_0 : i32, i32
  }
  func.func @transform_3(%arg0: i32) -> (i32, i32) {
    %c0_i32 = arith.constant 0 : i32
    %c0_i32_0 = arith.constant 0 : i32
    %c0_i32_1 = arith.constant 0 : i32
    return %c0_i32, %c0_i32_0 : i32, i32
  }
  func.func @transform_4(%arg0: i32) -> (i32, i32) {
    %c0_i32 = arith.constant 0 : i32
    %c0_i32_0 = arith.constant 0 : i32
    %c0_i32_1 = arith.constant 0 : i32
    return %c0_i32, %c0_i32_0 : i32, i32
  }
  func.func @transform_5(%arg0: i32) -> (i32, i32) {
    %c0_i32 = arith.constant 0 : i32
    %c0_i32_0 = arith.constant 0 : i32
    %c0_i32_1 = arith.constant 0 : i32
    return %c0_i32, %c0_i32_0 : i32, i32
  }
  func.func @transform_6(%arg0: i32) -> (i32, i32) {
    %c0_i32 = arith.constant 0 : i32
    %c0_i32_0 = arith.constant 0 : i32
    return %arg0, %c0_i32 : i32, i32
  }
}

</mosaic_0001>

<llo_original>
// kernel: _fused_mlp_forward.1
$region0: #{_fused_mlp_forward.1}
  #allocation0 [shape = 'u32[]', space=smem, size = 0x4, offset = 0x4, fixed_abs, tag = 'smem constant byte address 0x4 - core index']
  #allocation1 [shape = 'u32[72,128]{1,0:T(1,128)}', space=vmem, size = 0x9000, scoped, tag = 'internal scratch']
  %s0 = inlined_call_operand.vmem [shape: bf16[16,128], index: 0, kind: input, shape index: {}]
  %s1 = inlined_call_operand.hbm [shape: bf16[128,128], index: 1, kind: input, shape index: {}]
  %s2 = inlined_call_operand.vmem [shape: f32[1,128], index: 2, kind: input, shape index: {}]
  %s3 = inlined_call_operand.hbm [shape: bf16[128,128], index: 3, kind: input, shape index: {}]
  %s4 = inlined_call_operand.vmem [shape: f32[1,128], index: 4, kind: input, shape index: {}]
  %s5 = inlined_call_operand.hbm [shape: bf16[128,128], index: 5, kind: input, shape index: {}]
  %s6 = inlined_call_operand.vmem [shape: f32[16,128], index: 6, kind: output, shape index: {}]
  %s7 = sld [smem:[#allocation0]]
  $region46: #{_fused_mlp_forward.1} parent=0
    _
  %s9 = ssub.s32 1, %s7
  %s10 = scalar_select 0, %s9, %s7
  $region1: #{_fused_mlp_forward.1} parent=0
    #allocation2 [shape = 'u8[32768]{0}', space=vmem, size = 0x8000, scoped, tag = 'input window, operand 1, single buffered']
    #allocation3 [shape = 's32[1]{0}', space=sflag, size = 0x4, scoped, tag = 'scoped memory for _fused_mlp_forward.1']
    #allocation4 [shape = 'u8[32768]{0}', space=vmem, size = 0x8000, scoped, tag = 'input window, operand 3, single buffered']
    #allocation5 [shape = 's32[1]{0}', space=sflag, size = 0x4, scoped, tag = 'scoped memory for _fused_mlp_forward.1']
    #allocation6 [shape = 'u8[32768]{0}', space=vmem, size = 0x8000, scoped, tag = 'input window, operand 5, single buffered']
    %11 = vsyncpa [#allocation3], 0
    %12 = vsyncpa [#allocation5], 0
    // Predicated region
    $region2: #{_fused_mlp_forward.1} parent=1 // pred_check
      _
    $region3: #{_fused_mlp_forward.1} parent=1 // pred_check_branch
      %14 = sbr.rel (0) target = $region5
    $region4: #{_fused_mlp_forward.1} parent=1 // pred_region
      _
    $region5: #{_fused_mlp_forward.1} parent=1 // pred_fallthru
      _
    // Predicated region
    $region6: #{_fused_mlp_forward.1} parent=1 // pred_check
      _
    $region7: #{_fused_mlp_forward.1} parent=1 // pred_check_branch
      %16 = sbr.rel (0) target = $region9
    $region8: #{_fused_mlp_forward.1} parent=1 // pred_region
      %18 = vsyncadd [#allocation3], 0
      %s19 = sshll.u32 %s1, 4
      %s20 = int_to_ptr.hbm [resolvable:$true] %s19
      %s21 = sshll.u32 [#allocation2], 4
      %s22 = int_to_ptr.vmem [resolvable:$true] %s21
      %27 = dma.hbm_to_vmem [thread:$0]  %s20, 1024, %s22, [#allocation3], 64, 64, 4
    $region9: #{_fused_mlp_forward.1} parent=1 // pred_fallthru
      _
    // Predicated region
    $region10: #{_fused_mlp_forward.1} parent=1 // pred_check
      _
    $region11: #{_fused_mlp_forward.1} parent=1 // pred_check_branch
      %29 = sbr.rel (0) target = $region13
    $region12: #{_fused_mlp_forward.1} parent=1 // pred_region
      _
    $region13: #{_fused_mlp_forward.1} parent=1 // pred_fallthru
      _
    // Predicated region
    $region14: #{_fused_mlp_forward.1} parent=1 // pred_check
      _
    $region15: #{_fused_mlp_forward.1} parent=1 // pred_check_branch
      %31 = sbr.rel (0) target = $region17
    $region16: #{_fused_mlp_forward.1} parent=1 // pred_region
      %33 = vsyncadd [#allocation5], 0
      %s34 = sshll.u32 %s3, 4
      %s35 = int_to_ptr.hbm [resolvable:$true] %s34
      %s36 = sshll.u32 [#allocation4], 4
      %s37 = int_to_ptr.vmem [resolvable:$true] %s36
      %42 = dma.hbm_to_vmem [thread:$0]  %s35, 1024, %s37, [#allocation5], 64, 64, 4
    $region17: #{_fused_mlp_forward.1} parent=1 // pred_fallthru
      _
    // Predicated region
    $region18: #{_fused_mlp_forward.1} parent=1 // pred_check
      _
    $region19: #{_fused_mlp_forward.1} parent=1 // pred_check_branch
      %44 = sbr.rel (0) target = $region21
    $region20: #{_fused_mlp_forward.1} parent=1 // pred_region
      _
    $region21: #{_fused_mlp_forward.1} parent=1 // pred_fallthru
      _
    // Predicated region
    $region22: #{_fused_mlp_forward.1} parent=1 // pred_check
      _
    $region23: #{_fused_mlp_forward.1} parent=1 // pred_check_branch
      %46 = sbr.rel (0) target = $region25
    $region24: #{_fused_mlp_forward.1} parent=1 // pred_region
      %48 = vsyncadd [#allocation5], 0
      %s49 = sshll.u32 %s5, 4
      %s50 = int_to_ptr.hbm [resolvable:$true] %s49
      %s51 = sshll.u32 [#allocation6], 4
      %s52 = int_to_ptr.vmem [resolvable:$true] %s51
      %57 = dma.hbm_to_vmem [thread:$0]  %s50, 1024, %s52, [#allocation5], 64, 64, 4
    $region25: #{_fused_mlp_forward.1} parent=1 // pred_fallthru
      _
    // Predicated region
    $region26: #{_fused_mlp_forward.1} parent=1 // pred_check
      _
    $region27: #{_fused_mlp_forward.1} parent=1 // pred_check_branch
      %59 = sbr.rel (0) target = $region29
    $region28: #{_fused_mlp_forward.1} parent=1 // pred_region
      %61 = dma.done [#allocation3], 1024
    $region29: #{_fused_mlp_forward.1} parent=1 // pred_fallthru
      _
    // Predicated region
    $region30: #{_fused_mlp_forward.1} parent=1 // pred_check
      _
    $region31: #{_fused_mlp_forward.1} parent=1 // pred_check_branch
      %63 = sbr.rel (0) target = $region33
    $region32: #{_fused_mlp_forward.1} parent=1 // pred_region
      %65 = dma.done [#allocation5], 1024
    $region33: #{_fused_mlp_forward.1} parent=1 // pred_fallthru
      _
    // Predicated region
    $region34: #{_fused_mlp_forward.1} parent=1 // pred_check
      _
    $region35: #{_fused_mlp_forward.1} parent=1 // pred_check_branch
      %67 = sbr.rel (0) target = $region37
    $region36: #{_fused_mlp_forward.1} parent=1 // pred_region
      %69 = dma.done [#allocation5], 1024
    $region37: #{_fused_mlp_forward.1} parent=1 // pred_fallthru
      _
    %v70 = vld [vmem:[%s0] sm:$0xf]
    %v71 = vld [vmem:[%s0 + $0x4] sm:$0xf]
    %v72 = vld [vmem:[#allocation2] sm:$0xf]
    %v73 = vld [vmem:[#allocation2 + $0x4] sm:$0xf]
    %v74 = vld [vmem:[#allocation2 + $0x8] sm:$0xf]
    %v75 = vld [vmem:[#allocation2 + $0xc] sm:$0xf]
    %v76 = vld [vmem:[#allocation2 + $0x10] sm:$0xf]
    %v77 = vld [vmem:[#allocation2 + $0x14] sm:$0xf]
    %v78 = vld [vmem:[#allocation2 + $0x18] sm:$0xf]
    %v79 = vld [vmem:[#allocation2 + $0x1c] sm:$0xf]
    %v80 = vld [vmem:[#allocation2 + $0x20] sm:$0xf]
    %v81 = vld [vmem:[#allocation2 + $0x24] sm:$0xf]
    %v82 = vld [vmem:[#allocation2 + $0x28] sm:$0xf]
    %v83 = vld [vmem:[#allocation2 + $0x2c] sm:$0xf]
    %v84 = vld [vmem:[#allocation2 + $0x30] sm:$0xf]
    %v85 = vld [vmem:[#allocation2 + $0x34] sm:$0xf]
    %v86 = vld [vmem:[#allocation2 + $0x38] sm:$0xf]
    %v87 = vld [vmem:[#allocation2 + $0x3c] sm:$0xf]
    %v88 = vld [vmem:[%s2] sm:$0x1]
    %v90 = vperm.slane %v88, 0
    %v94 = vunpack.c.l.b16 %v70
    %v95 = vunpack.c.l.b16 %v71
    %v96 = vpack.c.b16 %v95, %v94
    %v114 = vunpack.c.l.b16 %v72
    %v115 = vunpack.c.l.b16 %v73
    %v116 = vunpack.c.l.b16 %v74
    %v117 = vunpack.c.l.b16 %v75
    %v118 = vunpack.c.l.b16 %v76
    %v119 = vunpack.c.l.b16 %v77
    %v120 = vunpack.c.l.b16 %v78
    %v121 = vunpack.c.l.b16 %v79
    %v122 = vunpack.c.l.b16 %v80
    %v123 = vunpack.c.l.b16 %v81
    %v124 = vunpack.c.l.b16 %v82
    %v125 = vunpack.c.l.b16 %v83
    %v126 = vunpack.c.l.b16 %v84
    %v127 = vunpack.c.l.b16 %v85
    %v128 = vunpack.c.l.b16 %v86
    %v129 = vunpack.c.l.b16 %v87
    %v130 = vpack.c.b16 %v115, %v114
    %v131 = vpack.c.b16 %v117, %v116
    %v132 = vpack.c.b16 %v119, %v118
    %v133 = vpack.c.b16 %v121, %v120
    %v134 = vpack.c.b16 %v123, %v122
    %v135 = vpack.c.b16 %v125, %v124
    %v136 = vpack.c.b16 %v127, %v126
    %v137 = vpack.c.b16 %v129, %v128
    %146 = vmatpush.bf16.msra.mxu0 %v137
    %147 = vmatpush.bf16.msra.mxu0 %v136
    %148 = vmatpush.bf16.msra.mxu0 %v135
    %149 = vmatpush.bf16.msra.mxu0 %v134
    %150 = vmatpush.bf16.msra.mxu0 %v133
    %151 = vmatpush.bf16.msra.mxu0 %v132
    %152 = vmatpush.bf16.msra.mxu0 %v131
    %153 = vmatpush.bf16.msra.mxu0 %v130
    %154 = vmatmul.bf16.gmra.mxu0 %v96
    %v155 = vpop.f32.mrf.mxu0
    %v156 = vadd.f32 %v90, %v155
    %v157 = vpop.f32.mrf.mxu0
    %v158 = vadd.f32 %v90, %v157
    %159 = vdwg.mxu0
    %v160 = vmax.f32 %v156, 0.0
    %v161 = vmax.f32 %v158, 0.0
    %v162 = vpack.c.bf16 %v161, %v160
    %v163 = vld [vmem:[#allocation4] sm:$0xf]
    %v164 = vld [vmem:[#allocation4 + $0x4] sm:$0xf]
    %v165 = vld [vmem:[#allocation4 + $0x8] sm:$0xf]
    %v166 = vld [vmem:[#allocation4 + $0xc] sm:$0xf]
    %v167 = vld [vmem:[#allocation4 + $0x10] sm:$0xf]
    %v168 = vld [vmem:[#allocation4 + $0x14] sm:$0xf]
    %v169 = vld [vmem:[#allocation4 + $0x18] sm:$0xf]
    %v170 = vld [vmem:[#allocation4 + $0x1c] sm:$0xf]
    %v171 = vld [vmem:[#allocation4 + $0x20] sm:$0xf]
    %v172 = vld [vmem:[#allocation4 + $0x24] sm:$0xf]
    %v173 = vld [vmem:[#allocation4 + $0x28] sm:$0xf]
    %v174 = vld [vmem:[#allocation4 + $0x2c] sm:$0xf]
    %v175 = vld [vmem:[#allocation4 + $0x30] sm:$0xf]
    %v176 = vld [vmem:[#allocation4 + $0x34] sm:$0xf]
    %v177 = vld [vmem:[#allocation4 + $0x38] sm:$0xf]
    %v178 = vld [vmem:[#allocation4 + $0x3c] sm:$0xf]
    %v179 = vld [vmem:[%s4] sm:$0x1]
    %v181 = vperm.slane %v179, 0
    %v199 = vunpack.c.l.b16 %v163
    %v200 = vunpack.c.l.b16 %v164
    %v201 = vunpack.c.l.b16 %v165
    %v202 = vunpack.c.l.b16 %v166
    %v203 = vunpack.c.l.b16 %v167
    %v204 = vunpack.c.l.b16 %v168
    %v205 = vunpack.c.l.b16 %v169
    %v206 = vunpack.c.l.b16 %v170
    %v207 = vunpack.c.l.b16 %v171
    %v208 = vunpack.c.l.b16 %v172
    %v209 = vunpack.c.l.b16 %v173
    %v210 = vunpack.c.l.b16 %v174
    %v211 = vunpack.c.l.b16 %v175
    %v212 = vunpack.c.l.b16 %v176
    %v213 = vunpack.c.l.b16 %v177
    %v214 = vunpack.c.l.b16 %v178
    %v215 = vpack.c.b16 %v200, %v199
    %v216 = vpack.c.b16 %v202, %v201
    %v217 = vpack.c.b16 %v204, %v203
    %v218 = vpack.c.b16 %v206, %v205
    %v219 = vpack.c.b16 %v208, %v207
    %v220 = vpack.c.b16 %v210, %v209
    %v221 = vpack.c.b16 %v212, %v211
    %v222 = vpack.c.b16 %v214, %v213
    %231 = vmatpush.bf16.msra.mxu0 %v222
    %232 = vmatpush.bf16.msra.mxu0 %v221
    %233 = vmatpush.bf16.msra.mxu0 %v220
    %234 = vmatpush.bf16.msra.mxu0 %v219
    %235 = vmatpush.bf16.msra.mxu0 %v218
    %236 = vmatpush.bf16.msra.mxu0 %v217
    %237 = vmatpush.bf16.msra.mxu0 %v216
    %238 = vmatpush.bf16.msra.mxu0 %v215
    %239 = vmatmul.bf16.gmra.mxu0 %v162
    %v240 = vpop.f32.mrf.mxu0
    %v241 = vadd.f32 %v181, %v240
    %v242 = vpop.f32.mrf.mxu0
    %v243 = vadd.f32 %v181, %v242
    %244 = vdwg.mxu0
    %v245 = vmax.f32 %v241, 0.0
    %v246 = vmax.f32 %v243, 0.0
    %v247 = vpack.c.bf16 %v246, %v245
    %v248 = vld [vmem:[#allocation6] sm:$0xf]
    %v249 = vld [vmem:[#allocation6 + $0x4] sm:$0xf]
    %v250 = vld [vmem:[#allocation6 + $0x8] sm:$0xf]
    %v251 = vld [vmem:[#allocation6 + $0xc] sm:$0xf]
    %v252 = vld [vmem:[#allocation6 + $0x10] sm:$0xf]
    %v253 = vld [vmem:[#allocation6 + $0x14] sm:$0xf]
    %v254 = vld [vmem:[#allocation6 + $0x18] sm:$0xf]
    %v255 = vld [vmem:[#allocation6 + $0x1c] sm:$0xf]
    %v256 = vld [vmem:[#allocation6 + $0x20] sm:$0xf]
    %v257 = vld [vmem:[#allocation6 + $0x24] sm:$0xf]
    %v258 = vld [vmem:[#allocation6 + $0x28] sm:$0xf]
    %v259 = vld [vmem:[#allocation6 + $0x2c] sm:$0xf]
    %v260 = vld [vmem:[#allocation6 + $0x30] sm:$0xf]
    %v261 = vld [vmem:[#allocation6 + $0x34] sm:$0xf]
    %v262 = vld [vmem:[#allocation6 + $0x38] sm:$0xf]
    %v263 = vld [vmem:[#allocation6 + $0x3c] sm:$0xf]
    %v280 = vunpack.c.l.b16 %v248
    %v281 = vunpack.c.l.b16 %v249
    %v282 = vunpack.c.l.b16 %v250
    %v283 = vunpack.c.l.b16 %v251
    %v284 = vunpack.c.l.b16 %v252
    %v285 = vunpack.c.l.b16 %v253
    %v286 = vunpack.c.l.b16 %v254
    %v287 = vunpack.c.l.b16 %v255
    %v288 = vunpack.c.l.b16 %v256
    %v289 = vunpack.c.l.b16 %v257
    %v290 = vunpack.c.l.b16 %v258
    %v291 = vunpack.c.l.b16 %v259
    %v292 = vunpack.c.l.b16 %v260
    %v293 = vunpack.c.l.b16 %v261
    %v294 = vunpack.c.l.b16 %v262
    %v295 = vunpack.c.l.b16 %v263
    %v296 = vpack.c.b16 %v281, %v280
    %v297 = vpack.c.b16 %v283, %v282
    %v298 = vpack.c.b16 %v285, %v284
    %v299 = vpack.c.b16 %v287, %v286
    %v300 = vpack.c.b16 %v289, %v288
    %v301 = vpack.c.b16 %v291, %v290
    %v302 = vpack.c.b16 %v293, %v292
    %v303 = vpack.c.b16 %v295, %v294
    %312 = vmatpush.bf16.msra.mxu0 %v303
    %313 = vmatpush.bf16.msra.mxu0 %v302
    %314 = vmatpush.bf16.msra.mxu0 %v301
    %315 = vmatpush.bf16.msra.mxu0 %v300
    %316 = vmatpush.bf16.msra.mxu0 %v299
    %317 = vmatpush.bf16.msra.mxu0 %v298
    %318 = vmatpush.bf16.msra.mxu0 %v297
    %319 = vmatpush.bf16.msra.mxu0 %v296
    %320 = vmatmul.bf16.gmra.mxu0 %v247
    %v321 = vpop.f32.mrf.mxu0
    %v322 = vadd.f32 0.0, %v321
    %v323 = vpop.f32.mrf.mxu0
    %v324 = vadd.f32 0.0, %v323
    %325 = vdwg.mxu0
    %326 = vst [vmem:[%s6] sm:$0xff] %v322
    %327 = vst [vmem:[%s6 + $0x8] sm:$0xff] %v324
    // Predicated region
    $region38: #{_fused_mlp_forward.1} parent=1 // pred_check
      _
    $region39: #{_fused_mlp_forward.1} parent=1 // pred_check_branch
      %329 = sbr.rel (0) target = $region41
    $region40: #{_fused_mlp_forward.1} parent=1 // pred_region
      _
    $region41: #{_fused_mlp_forward.1} parent=1 // pred_fallthru
      _
    // Predicated region
    $region42: #{_fused_mlp_forward.1} parent=1 // pred_check
      _
    $region43: #{_fused_mlp_forward.1} parent=1 // pred_check_branch
      %331 = sbr.rel (0) target = $region45
    $region44: #{_fused_mlp_forward.1} parent=1 // pred_region
      _
    $region45: #{_fused_mlp_forward.1} parent=1 // pred_fallthru
      _
    %332 = vsyncpa [#allocation3], 1
    %333 = vsyncpa [#allocation5], 1

// kernel: _fused_mlp_forward.1
$region0: #{_fused_mlp_forward.1}
  #allocation0 [shape = 'u32[]', space=smem, size = 0x4, offset = 0x4, fixed_abs, tag = 'smem constant byte address 0x4 - core index']
  #allocation1 [shape = 'u32[72,128]{1,0:T(1,128)}', space=vmem, size = 0x9000, scoped, tag = 'internal scratch']
  %s0 = inlined_call_operand.vmem [shape: bf16[16,128], index: 0, kind: input, shape index: {}]
  %s1 = inlined_call_operand.hbm [shape: bf16[128,128], index: 1, kind: input, shape index: {}]
  %s2 = inlined_call_operand.vmem [shape: f32[1,128], index: 2, kind: input, shape index: {}]
  %s3 = inlined_call_operand.hbm [shape: bf16[128,128], index: 3, kind: input, shape index: {}]
  %s4 = inlined_call_operand.vmem [shape: f32[1,128], index: 4, kind: input, shape index: {}]
  %s5 = inlined_call_operand.hbm [shape: bf16[128,128], index: 5, kind: input, shape index: {}]
  %s6 = inlined_call_operand.vmem [shape: f32[16,128], index: 6, kind: output, shape index: {}]
  %s7 = sld [smem:[#allocation0]]
  $region46: #{_fused_mlp_forward.1} parent=0
    _
  %s9 = ssub.s32 1, %s7
  %s10 = scalar_select 0, %s9, %s7
  $region1: #{_fused_mlp_forward.1} parent=0
    #allocation2 [shape = 'u8[32768]{0}', space=vmem, size = 0x8000, scoped, tag = 'input window, operand 1, single buffered']
    #allocation3 [shape = 's32[1]{0}', space=sflag, size = 0x4, scoped, tag = 'scoped memory for _fused_mlp_forward.1']
    #allocation4 [shape = 'u8[32768]{0}', space=vmem, size = 0x8000, scoped, tag = 'input window, operand 3, single buffered']
    #allocation5 [shape = 's32[1]{0}', space=sflag, size = 0x4, scoped, tag = 'scoped memory for _fused_mlp_forward.1']
    #allocation6 [shape = 'u8[32768]{0}', space=vmem, size = 0x8000, scoped, tag = 'input window, operand 5, single buffered']
    %11 = vsyncpa [#allocation3], 0
    %12 = vsyncpa [#allocation5], 0
    // Predicated region
    $region2: #{_fused_mlp_forward.1} parent=1 // pred_check
      _
    $region3: #{_fused_mlp_forward.1} parent=1 // pred_check_branch
      %14 = sbr.rel (0) target = $region5
    $region4: #{_fused_mlp_forward.1} parent=1 // pred_region
      _
    $region5: #{_fused_mlp_forward.1} parent=1 // pred_fallthru
      _
    // Predicated region
    $region6: #{_fused_mlp_forward.1} parent=1 // pred_check
      _
    $region7: #{_fused_mlp_forward.1} parent=1 // pred_check_branch
      %16 = sbr.rel (0) target = $region9
    $region8: #{_fused_mlp_forward.1} parent=1 // pred_region
      %18 = vsyncadd [#allocation3], 0
      %s19 = sshll.u32 %s1, 4
      %s20 = int_to_ptr.hbm [resolvable:$true] %s19
      %s21 = sshll.u32 [#allocation2], 4
      %s22 = int_to_ptr.vmem [resolvable:$true] %s21
      %27 = dma.hbm_to_vmem [thread:$0]  %s20, 1024, %s22, [#allocation3], 64, 64, 4
    $region9: #{_fused_mlp_forward.1} parent=1 // pred_fallthru
      _
    // Predicated region
    $region10: #{_fused_mlp_forward.1} parent=1 // pred_check
      _
    $region11: #{_fused_mlp_forward.1} parent=1 // pred_check_branch
      %29 = sbr.rel (0) target = $region13
    $region12: #{_fused_mlp_forward.1} parent=1 // pred_region
      _
    $region13: #{_fused_mlp_forward.1} parent=1 // pred_fallthru
      _
    // Predicated region
    $region14: #{_fused_mlp_forward.1} parent=1 // pred_check
      _
    $region15: #{_fused_mlp_forward.1} parent=1 // pred_check_branch
      %31 = sbr.rel (0) target = $region17
    $region16: #{_fused_mlp_forward.1} parent=1 // pred_region
      %33 = vsyncadd [#allocation5], 0
      %s34 = sshll.u32 %s3, 4
      %s35 = int_to_ptr.hbm [resolvable:$true] %s34
      %s36 = sshll.u32 [#allocation4], 4
      %s37 = int_to_ptr.vmem [resolvable:$true] %s36
      %42 = dma.hbm_to_vmem [thread:$0]  %s35, 1024, %s37, [#allocation5], 64, 64, 4
    $region17: #{_fused_mlp_forward.1} parent=1 // pred_fallthru
      _
    // Predicated region
    $region18: #{_fused_mlp_forward.1} parent=1 // pred_check
      _
    $region19: #{_fused_mlp_forward.1} parent=1 // pred_check_branch
      %44 = sbr.rel (0) target = $region21
    $region20: #{_fused_mlp_forward.1} parent=1 // pred_region
      _
    $region21: #{_fused_mlp_forward.1} parent=1 // pred_fallthru
      _
    // Predicated region
    $region22: #{_fused_mlp_forward.1} parent=1 // pred_check
      _
    $region23: #{_fused_mlp_forward.1} parent=1 // pred_check_branch
      %46 = sbr.rel (0) target = $region25
    $region24: #{_fused_mlp_forward.1} parent=1 // pred_region
      %48 = vsyncadd [#allocation5], 0
      %s49 = sshll.u32 %s5, 4
      %s50 = int_to_ptr.hbm [resolvable:$true] %s49
      %s51 = sshll.u32 [#allocation6], 4
      %s52 = int_to_ptr.vmem [resolvable:$true] %s51
      %57 = dma.hbm_to_vmem [thread:$0]  %s50, 1024, %s52, [#allocation5], 64, 64, 4
    $region25: #{_fused_mlp_forward.1} parent=1 // pred_fallthru
      _
    // Predicated region
    $region26: #{_fused_mlp_forward.1} parent=1 // pred_check
      _
    $region27: #{_fused_mlp_forward.1} parent=1 // pred_check_branch
      %59 = sbr.rel (0) target = $region29
    $region28: #{_fused_mlp_forward.1} parent=1 // pred_region
      %61 = dma.done [#allocation3], 1024
    $region29: #{_fused_mlp_forward.1} parent=1 // pred_fallthru
      _
    // Predicated region
    $region30: #{_fused_mlp_forward.1} parent=1 // pred_check
      _
    $region31: #{_fused_mlp_forward.1} parent=1 // pred_check_branch
      %63 = sbr.rel (0) target = $region33
    $region32: #{_fused_mlp_forward.1} parent=1 // pred_region
      %65 = dma.done [#allocation5], 1024
    $region33: #{_fused_mlp_forward.1} parent=1 // pred_fallthru
      _
    // Predicated region
    $region34: #{_fused_mlp_forward.1} parent=1 // pred_check
      _
    $region35: #{_fused_mlp_forward.1} parent=1 // pred_check_branch
      %67 = sbr.rel (0) target = $region37
    $region36: #{_fused_mlp_forward.1} parent=1 // pred_region
      %69 = dma.done [#allocation5], 1024
    $region37: #{_fused_mlp_forward.1} parent=1 // pred_fallthru
      _
    %v70 = vld [vmem:[%s0] sm:$0xf]
    %v71 = vld [vmem:[%s0 + $0x4] sm:$0xf]
    %v72 = vld [vmem:[#allocation2] sm:$0xf]
    %v73 = vld [vmem:[#allocation2 + $0x4] sm:$0xf]
    %v74 = vld [vmem:[#allocation2 + $0x8] sm:$0xf]
    %v75 = vld [vmem:[#allocation2 + $0xc] sm:$0xf]
    %v76 = vld [vmem:[#allocation2 + $0x10] sm:$0xf]
    %v77 = vld [vmem:[#allocation2 + $0x14] sm:$0xf]
    %v78 = vld [vmem:[#allocation2 + $0x18] sm:$0xf]
    %v79 = vld [vmem:[#allocation2 + $0x1c] sm:$0xf]
    %v80 = vld [vmem:[#allocation2 + $0x20] sm:$0xf]
    %v81 = vld [vmem:[#allocation2 + $0x24] sm:$0xf]
    %v82 = vld [vmem:[#allocation2 + $0x28] sm:$0xf]
    %v83 = vld [vmem:[#allocation2 + $0x2c] sm:$0xf]
    %v84 = vld [vmem:[#allocation2 + $0x30] sm:$0xf]
    %v85 = vld [vmem:[#allocation2 + $0x34] sm:$0xf]
    %v86 = vld [vmem:[#allocation2 + $0x38] sm:$0xf]
    %v87 = vld [vmem:[#allocation2 + $0x3c] sm:$0xf]
    %v88 = vld [vmem:[%s2] sm:$0x1]
    %v90 = vperm.slane %v88, 0
    %v94 = vunpack.c.l.b16 %v70
    %v95 = vunpack.c.l.b16 %v71
    %v96 = vpack.c.b16 %v95, %v94
    %v114 = vunpack.c.l.b16 %v72
    %v115 = vunpack.c.l.b16 %v73
    %v116 = vunpack.c.l.b16 %v74
    %v117 = vunpack.c.l.b16 %v75
    %v118 = vunpack.c.l.b16 %v76
    %v119 = vunpack.c.l.b16 %v77
    %v120 = vunpack.c.l.b16 %v78
    %v121 = vunpack.c.l.b16 %v79
    %v122 = vunpack.c.l.b16 %v80
    %v123 = vunpack.c.l.b16 %v81
    %v124 = vunpack.c.l.b16 %v82
    %v125 = vunpack.c.l.b16 %v83
    %v126 = vunpack.c.l.b16 %v84
    %v127 = vunpack.c.l.b16 %v85
    %v128 = vunpack.c.l.b16 %v86
    %v129 = vunpack.c.l.b16 %v87
    %v130 = vpack.c.b16 %v115, %v114
    %v131 = vpack.c.b16 %v117, %v116
    %v132 = vpack.c.b16 %v119, %v118
    %v133 = vpack.c.b16 %v121, %v120
    %v134 = vpack.c.b16 %v123, %v122
    %v135 = vpack.c.b16 %v125, %v124
    %v136 = vpack.c.b16 %v127, %v126
    %v137 = vpack.c.b16 %v129, %v128
    %146 = vmatpush.bf16.msra.mxu0 %v137
    %147 = vmatpush.bf16.msra.mxu0 %v136
    %148 = vmatpush.bf16.msra.mxu0 %v135
    %149 = vmatpush.bf16.msra.mxu0 %v134
    %150 = vmatpush.bf16.msra.mxu0 %v133
    %151 = vmatpush.bf16.msra.mxu0 %v132
    %152 = vmatpush.bf16.msra.mxu0 %v131
    %153 = vmatpush.bf16.msra.mxu0 %v130
    %154 = vmatmul.bf16.gmra.mxu0 %v96
    %v155 = vpop.f32.mrf.mxu0
    %v156 = vadd.f32 %v90, %v155
    %v157 = vpop.f32.mrf.mxu0
    %v158 = vadd.f32 %v90, %v157
    %159 = vdwg.mxu0
    %v160 = vmax.f32 %v156, 0.0
    %v161 = vmax.f32 %v158, 0.0
    %v162 = vpack.c.bf16 %v161, %v160
    %v163 = vld [vmem:[#allocation4] sm:$0xf]
    %v164 = vld [vmem:[#allocation4 + $0x4] sm:$0xf]
    %v165 = vld [vmem:[#allocation4 + $0x8] sm:$0xf]
    %v166 = vld [vmem:[#allocation4 + $0xc] sm:$0xf]
    %v167 = vld [vmem:[#allocation4 + $0x10] sm:$0xf]
    %v168 = vld [vmem:[#allocation4 + $0x14] sm:$0xf]
    %v169 = vld [vmem:[#allocation4 + $0x18] sm:$0xf]
    %v170 = vld [vmem:[#allocation4 + $0x1c] sm:$0xf]
    %v171 = vld [vmem:[#allocation4 + $0x20] sm:$0xf]
    %v172 = vld [vmem:[#allocation4 + $0x24] sm:$0xf]
    %v173 = vld [vmem:[#allocation4 + $0x28] sm:$0xf]
    %v174 = vld [vmem:[#allocation4 + $0x2c] sm:$0xf]
    %v175 = vld [vmem:[#allocation4 + $0x30] sm:$0xf]
    %v176 = vld [vmem:[#allocation4 + $0x34] sm:$0xf]
    %v177 = vld [vmem:[#allocation4 + $0x38] sm:$0xf]
    %v178 = vld [vmem:[#allocation4 + $0x3c] sm:$0xf]
    %v179 = vld [vmem:[%s4] sm:$0x1]
    %v181 = vperm.slane %v179, 0
    %v199 = vunpack.c.l.b16 %v163
    %v200 = vunpack.c.l.b16 %v164
    %v201 = vunpack.c.l.b16 %v165
    %v202 = vunpack.c.l.b16 %v166
    %v203 = vunpack.c.l.b16 %v167
    %v204 = vunpack.c.l.b16 %v168
    %v205 = vunpack.c.l.b16 %v169
    %v206 = vunpack.c.l.b16 %v170
    %v207 = vunpack.c.l.b16 %v171
    %v208 = vunpack.c.l.b16 %v172
    %v209 = vunpack.c.l.b16 %v173
    %v210 = vunpack.c.l.b16 %v174
    %v211 = vunpack.c.l.b16 %v175
    %v212 = vunpack.c.l.b16 %v176
    %v213 = vunpack.c.l.b16 %v177
    %v214 = vunpack.c.l.b16 %v178
    %v215 = vpack.c.b16 %v200, %v199
    %v216 = vpack.c.b16 %v202, %v201
    %v217 = vpack.c.b16 %v204, %v203
    %v218 = vpack.c.b16 %v206, %v205
    %v219 = vpack.c.b16 %v208, %v207
    %v220 = vpack.c.b16 %v210, %v209
    %v221 = vpack.c.b16 %v212, %v211
    %v222 = vpack.c.b16 %v214, %v213
    %231 = vmatpush.bf16.msra.mxu0 %v222
    %232 = vmatpush.bf16.msra.mxu0 %v221
    %233 = vmatpush.bf16.msra.mxu0 %v220
    %234 = vmatpush.bf16.msra.mxu0 %v219
    %235 = vmatpush.bf16.msra.mxu0 %v218
    %236 = vmatpush.bf16.msra.mxu0 %v217
    %237 = vmatpush.bf16.msra.mxu0 %v216
    %238 = vmatpush.bf16.msra.mxu0 %v215
    %239 = vmatmul.bf16.gmra.mxu0 %v162
    %v240 = vpop.f32.mrf.mxu0
    %v241 = vadd.f32 %v181, %v240
    %v242 = vpop.f32.mrf.mxu0
    %v243 = vadd.f32 %v181, %v242
    %244 = vdwg.mxu0
    %v245 = vmax.f32 %v241, 0.0
    %v246 = vmax.f32 %v243, 0.0
    %v247 = vpack.c.bf16 %v246, %v245
    %v248 = vld [vmem:[#allocation6] sm:$0xf]
    %v249 = vld [vmem:[#allocation6 + $0x4] sm:$0xf]
    %v250 = vld [vmem:[#allocation6 + $0x8] sm:$0xf]
    %v251 = vld [vmem:[#allocation6 + $0xc] sm:$0xf]
    %v252 = vld [vmem:[#allocation6 + $0x10] sm:$0xf]
    %v253 = vld [vmem:[#allocation6 + $0x14] sm:$0xf]
    %v254 = vld [vmem:[#allocation6 + $0x18] sm:$0xf]
    %v255 = vld [vmem:[#allocation6 + $0x1c] sm:$0xf]
    %v256 = vld [vmem:[#allocation6 + $0x20] sm:$0xf]
    %v257 = vld [vmem:[#allocation6 + $0x24] sm:$0xf]
    %v258 = vld [vmem:[#allocation6 + $0x28] sm:$0xf]
    %v259 = vld [vmem:[#allocation6 + $0x2c] sm:$0xf]
    %v260 = vld [vmem:[#allocation6 + $0x30] sm:$0xf]
    %v261 = vld [vmem:[#allocation6 + $0x34] sm:$0xf]
    %v262 = vld [vmem:[#allocation6 + $0x38] sm:$0xf]
    %v263 = vld [vmem:[#allocation6 + $0x3c] sm:$0xf]
    %v280 = vunpack.c.l.b16 %v248
    %v281 = vunpack.c.l.b16 %v249
    %v282 = vunpack.c.l.b16 %v250
    %v283 = vunpack.c.l.b16 %v251
    %v284 = vunpack.c.l.b16 %v252
    %v285 = vunpack.c.l.b16 %v253
    %v286 = vunpack.c.l.b16 %v254
    %v287 = vunpack.c.l.b16 %v255
    %v288 = vunpack.c.l.b16 %v256
    %v289 = vunpack.c.l.b16 %v257
    %v290 = vunpack.c.l.b16 %v258
    %v291 = vunpack.c.l.b16 %v259
    %v292 = vunpack.c.l.b16 %v260
    %v293 = vunpack.c.l.b16 %v261
    %v294 = vunpack.c.l.b16 %v262
    %v295 = vunpack.c.l.b16 %v263
    %v296 = vpack.c.b16 %v281, %v280
    %v297 = vpack.c.b16 %v283, %v282
    %v298 = vpack.c.b16 %v285, %v284
    %v299 = vpack.c.b16 %v287, %v286
    %v300 = vpack.c.b16 %v289, %v288
    %v301 = vpack.c.b16 %v291, %v290
    %v302 = vpack.c.b16 %v293, %v292
    %v303 = vpack.c.b16 %v295, %v294
    %312 = vmatpush.bf16.msra.mxu0 %v303
    %313 = vmatpush.bf16.msra.mxu0 %v302
    %314 = vmatpush.bf16.msra.mxu0 %v301
    %315 = vmatpush.bf16.msra.mxu0 %v300
    %316 = vmatpush.bf16.msra.mxu0 %v299
    %317 = vmatpush.bf16.msra.mxu0 %v298
    %318 = vmatpush.bf16.msra.mxu0 %v297
    %319 = vmatpush.bf16.msra.mxu0 %v296
    %320 = vmatmul.bf16.gmra.mxu0 %v247
    %v321 = vpop.f32.mrf.mxu0
    %v322 = vadd.f32 0.0, %v321
    %v323 = vpop.f32.mrf.mxu0
    %v324 = vadd.f32 0.0, %v323
    %325 = vdwg.mxu0
    %326 = vst [vmem:[%s6] sm:$0xff] %v322
    %327 = vst [vmem:[%s6 + $0x8] sm:$0xff] %v324
    // Predicated region
    $region38: #{_fused_mlp_forward.1} parent=1 // pred_check
      _
    $region39: #{_fused_mlp_forward.1} parent=1 // pred_check_branch
      %329 = sbr.rel (0) target = $region41
    $region40: #{_fused_mlp_forward.1} parent=1 // pred_region
      _
    $region41: #{_fused_mlp_forward.1} parent=1 // pred_fallthru
      _
    // Predicated region
    $region42: #{_fused_mlp_forward.1} parent=1 // pred_check
      _
    $region43: #{_fused_mlp_forward.1} parent=1 // pred_check_branch
      %331 = sbr.rel (0) target = $region45
    $region44: #{_fused_mlp_forward.1} parent=1 // pred_region
      _
    $region45: #{_fused_mlp_forward.1} parent=1 // pred_fallthru
      _
    %332 = vsyncpa [#allocation3], 1
    %333 = vsyncpa [#allocation5], 1

</llo_original>
